<compile_context>
chip_gen: v5e
topology: v5e:2x2
jax: 0.10.0
libtpu: 0.0.40
codegen_flags: <defaults>
</compile_context>

<pallas_src>
import math
import jax
import jax.numpy as jnp
from jax.experimental import pallas as pl
from jax.experimental.pallas import tpu as pltpu


def _round_up(x, m):
    return ((x + m - 1) // m) * m


# ----------------------------- Pallas kernel --------------------------------
def _siln_head_kernel(h_ref, e_ref, m_ref, o_ref):
    # h_ref: (B, D)   bf16  -- pooled cascade representation (resident)
    # e_ref: (D, TU)  bf16  -- pre-transposed user-embedding tile (streamed)
    # m_ref: (B, TU)  int8  -- 1 where the user logit must be masked out
    # o_ref: (B, TU)  bf16  -- sigmoid(logits) tile (lane-dense stores)
    logits = jnp.dot(h_ref[...], e_ref[...],
                     preferred_element_type=jnp.float32)            # MXU, f32 acc
    masked = logits + m_ref[...].astype(jnp.float32) * jnp.float32(-1e9)
    o_ref[...] = jax.nn.sigmoid(masked).astype(o_ref.dtype)          # VPU + EUP


def _choose_tu(U, D, *, tu_max=4096, min_steps=4, e_dbuf_cap=16 << 20):
    """Pick a 128-aligned user-tile width.

    Large enough to amortize per-step overhead / lengthen DMA bursts, small
    enough that (a) the grid keeps >= min_steps steps (feeds both v7x TCs and
    keeps double-buffering live) and (b) the double-buffered bf16 e-tile stays
    within a v7x-friendly VMEM budget.
    """
    u128 = _round_up(U, 128)
    tu = min(_round_up(tu_max, 128), u128)
    while tu > 128 and (pl.cdiv(u128, tu) < min_steps
                        or 2 * D * tu * 2 > e_dbuf_cap):
        tu = _round_up(tu // 2, 128)
    return tu


def siln_head(h, user_emb_t, seen_mask, *, tu_max=4096):
    """pred = sigmoid(h @ user_emb_t + (-1e9 * seen_mask)), tiled over users.

    h:           (B, D)  float  -- pooled representation
    user_emb_t:  (D, U)  bf16   -- transposed user table, prepared ONCE
    seen_mask:   (B, U)  int8   -- 1 where the logit is masked (additive -1e9)
    returns:     (B, U)  bf16
    """
    B, D = h.shape
    _, U = user_emb_t.shape

    tu = _choose_tu(U, D, tu_max=tu_max)
    grid = (pl.cdiv(U, tu),)          # partial edge block: OOB writes dropped

    # VMEM budget estimate (double-buffered streams + resident h), clamped to
    # a limit that fits v5e (raise its 16 MiB scoped default) and leaves
    # headroom on v7x's 64 MiB physical VMEM.
    vmem_est = (2 * D * tu * 2          # e tile, bf16, double-buffered
                + 2 * B * tu * 1        # mask tile, int8
                + 2 * B * tu * 2        # out tile, bf16
                + 2 * B * D * 2)        # resident h, bf16
    vmem_limit = int(min(max(2 * vmem_est, 32 << 20), 48 << 20))

    # NOTE: B is tiny here so it stays a full (resident) block; if B grows,
    # pad/tile B to a multiple of 8 (sublane) and add a second "parallel"
    # grid axis over B.  If the e-stream DMA is still exposed after the tile
    # bump, the next lever is pipeline_mode=pl.Buffered(3) on the e BlockSpec.
    out = pl.pallas_call(
        _siln_head_kernel,
        out_shape=jax.ShapeDtypeStruct((B, U), jnp.bfloat16),
        grid_spec=pl.GridSpec(
            grid=grid,
            in_specs=[
                pl.BlockSpec((B, D), lambda j: (0, 0)),     # h: resident
                pl.BlockSpec((D, tu), lambda j: (0, j)),    # table: streamed
                pl.BlockSpec((B, tu), lambda j: (0, j)),    # mask tile (int8)
            ],
            out_specs=pl.BlockSpec((B, tu), lambda j: (0, j)),
        ),
        compiler_params=pltpu.CompilerParams(
            dimension_semantics=("parallel",),    # shard U tiles across TCs
            vmem_limit_bytes=vmem_limit,
        ),
    )(h.astype(jnp.bfloat16), user_emb_t, seen_mask.astype(jnp.int8))
    return out


# ------------------------------ JAX glue -------------------------------------
def prepare_siln_params(embed_weight):
    """One-time parameter prep, hoisted out of the per-step path.

    The bf16 transposed table is the kernel's dominant HBM stream; building it
    here (once) instead of per call removes ~3x the kernel's own traffic.
    """
    return {
        "user_emb": embed_weight,                                       # (U, D) f32
        "user_emb_t_bf16": jnp.transpose(embed_weight).astype(jnp.bfloat16),  # (D, U)
    }


def grouping(cas_embed, cas_mask, group_num):
    """Masked mean-pool the cascade into `group_num` contiguous groups."""
    B, S, D = cas_embed.shape
    chunk = S // group_num
    ce = cas_embed.reshape(B, group_num, chunk, D)
    cm = cas_mask.reshape(B, group_num, chunk, 1).astype(cas_embed.dtype)
    count = cm.sum(axis=2)                                            # (B, G, 1)
    group_embed = (ce * cm).sum(axis=2) / jnp.maximum(count, 1.0)     # (B, G, D)
    group_mask = (count[..., 0] > 0)
    return group_embed, group_mask, count


def siln_forward(params, cascade, cas_mask, seen_mask, group_num):
    # TODO(synk): GraphEncoder (GNN) is undefined in the reference -> identity.
    user_embeddings = params["user_emb"]                              # (U, D)
    # casEmbed = F.embedding(cascade, user_Embeddings)  (gather, glue)
    cas_embed = jnp.take(user_embeddings, cascade, axis=0)            # (B, S, D)
    group_embed, group_mask, count = grouping(cas_embed, cas_mask, group_num)
    # TODO(synk): CascadeEncoder (SAN) is undefined in the reference -> identity.
    # AvgPool1d(kernel=G) over h.transpose(1,2) == mean over G; hoisted out of
    # the kernel (O(B*G*D), trivial in XLA) so the kernel input is just (B, D).
    h = jnp.mean(group_embed.astype(jnp.float32), axis=1)             # (B, D)
    # matmul + mask + sigmoid: the Pallas kernel (tiled over the user axis).
    pred_user = siln_head(h, params["user_emb_t_bf16"], seen_mask)    # (B, U) bf16
    return pred_user


# ------------------------------- main ----------------------------------------
if __name__ == "__main__":
    B, S = 2, 8          # batch, cascade length
    U, D = 64, 32        # user_num, dim
    G = 4                # group_num (AvgPool1d kernel_size)

    key = jax.random.PRNGKey(0)
    k_emb, k_cas = jax.random.split(key)

    # Parameter init mirroring reset_parameters(): uniform(-1/sqrt(dim), 1/sqrt(dim)).
    stdv = 1.0 / math.sqrt(D)
    embed_weight = jax.random.uniform(
        k_emb, (U, D), dtype=jnp.float32, minval=-stdv, maxval=stdv)
    params = prepare_siln_params(embed_weight)   # bf16 transposed table cached once

    # Synthetic "dataProcess" outputs: cascade of user ids (0 = padding).
    cascade = jax.random.randint(k_cas, (B, S), minval=1, maxval=U)
    cascade = cascade.at[:, S - 2:].set(0)           # trailing padding
    cas_mask = (cascade != 0).astype(jnp.float32)    # (B, S)

    # label mask as int8 "seen" flags (1 = mask out with -1e9 inside the kernel):
    # padding user 0 and users already in the cascade.
    seen = jnp.zeros((B, U), dtype=jnp.int8)
    seen = seen.at[jnp.arange(B)[:, None], cascade].set(1)
    seen = seen.at[:, 0].set(1)                      # (B, U) int8

    pred = siln_forward(params, cascade, cas_mask, seen, G)
    pred = jax.block_until_ready(pred)

    assert pred.shape == (B, U) and pred.dtype == jnp.bfloat16
    pred_f32 = pred.astype(jnp.float32)
    assert bool(jnp.all(jnp.isfinite(pred_f32)))

    # Sanity check vs. a pure-JAX f32 reference of the same head (bf16 tolerance).
    label_mask_f32 = seen.astype(jnp.float32) * jnp.float32(-1e9)
    h_ref = jnp.mean(
        grouping(jnp.take(embed_weight, cascade, axis=0), cas_mask, G)[0], axis=1)
    ref = jax.nn.sigmoid(h_ref @ embed_weight.T + label_mask_f32)
    assert bool(jnp.all(jnp.abs(pred_f32 - ref) < 2e-2))

    print("KERNEL_OK")
</pallas_src>

<mosaic_0001>
module attributes {stable_mosaic.version = 11 : i64} {
  func.func @_siln_head_kernel(%arg0: i32, %arg1: memref<2x32xbf16, #tpu.memory_space<vmem>>, %arg2: memref<32x128xbf16, #tpu.memory_space<vmem>>, %arg3: memref<2x128xi8, #tpu.memory_space<vmem>>, %arg4: memref<2x128xbf16, #tpu.memory_space<vmem>>) attributes {dimension_semantics = [#tpu.dimension_semantics<parallel>], iteration_bounds = array<i64: 1>, scalar_prefetch = 0 : i64, scratch_operands = 0 : i64, tpu.core_type = #tpu.core_type<tc>, window_params = [{pipeline_mode = #tpu.pipeline_mode<synchronous>, transform_indices = @transform_0, window_bounds = array<i64: 2, 32>}, {transform_indices = @transform_1, window_bounds = array<i64: 32, 128>}, {transform_indices = @transform_2, window_bounds = array<i64: 2, 128>}, {transform_indices = @transform_3, window_bounds = array<i64: 2, 128>}]} {
    %c0 = arith.constant 0 : index
    %c0_0 = arith.constant 0 : index
    %0 = vector.load %arg1[%c0, %c0_0] : memref<2x32xbf16, #tpu.memory_space<vmem>>, vector<2x32xbf16>
    %c0_1 = arith.constant 0 : index
    %c0_2 = arith.constant 0 : index
    %1 = vector.load %arg2[%c0_1, %c0_2] : memref<32x128xbf16, #tpu.memory_space<vmem>>, vector<32x128xbf16>
    %cst = arith.constant dense<0.000000e+00> : vector<2x128xf32>
    %2 = tpu.matmul %0, %1, %cst {dimension_numbers = #tpu.dot_dimension_numbers<[1], [0], [0], [1], [0, 0, 1, 1], [], []>} : vector<2x32xbf16>, vector<32x128xbf16>, vector<2x128xf32> -> vector<2x128xf32>
    %c0_3 = arith.constant 0 : index
    %c0_4 = arith.constant 0 : index
    %3 = vector.load %arg3[%c0_3, %c0_4] : memref<2x128xi8, #tpu.memory_space<vmem>>, vector<2x128xi8>
    %4 = arith.sitofp %3 : vector<2x128xi8> to vector<2x128xf32>
    %cst_5 = arith.constant -1.000000e+09 : f32
    %5 = vector.broadcast %cst_5 : f32 to vector<2x128xf32>
    %6 = arith.mulf %4, %5 : vector<2x128xf32>
    %7 = arith.addf %2, %6 : vector<2x128xf32>
    %8 = arith.negf %7 : vector<2x128xf32>
    %9 = math.exp %8 : vector<2x128xf32>
    %cst_6 = arith.constant 1.000000e+00 : f32
    %10 = vector.broadcast %cst_6 : f32 to vector<2x128xf32>
    %11 = arith.addf %10, %9 : vector<2x128xf32>
    %12 = arith.divf %10, %11 : vector<2x128xf32>
    %13 = arith.truncf %12 : vector<2x128xf32> to vector<2x128xbf16>
    %c0_7 = arith.constant 0 : index
    %c0_8 = arith.constant 0 : index
    %14 = vector.load %arg4[%c0_7, %c0_8] : memref<2x128xbf16, #tpu.memory_space<vmem>>, vector<2x128xbf16>
    tpu.vector_store %arg4[%c0_7, %c0_8], %13 {strides = array<i32>} : memref<2x128xbf16, #tpu.memory_space<vmem>>, vector<2x128xbf16>,
    return
  }
  func.func @transform_0(%arg0: i32) -> (i32, i32) {
    %c0_i32 = arith.constant 0 : i32
    %c0_i32_0 = arith.constant 0 : i32
    %c0_i32_1 = arith.constant 0 : i32
    return %c0_i32, %c0_i32_0 : i32, i32
  }
  func.func @transform_1(%arg0: i32) -> (i32, i32) {
    %c0_i32 = arith.constant 0 : i32
    %c0_i32_0 = arith.constant 0 : i32
    return %c0_i32, %arg0 : i32, i32
  }
  func.func @transform_2(%arg0: i32) -> (i32, i32) {
    %c0_i32 = arith.constant 0 : i32
    %c0_i32_0 = arith.constant 0 : i32
    return %c0_i32, %arg0 : i32, i32
  }
  func.func @transform_3(%arg0: i32) -> (i32, i32) {
    %c0_i32 = arith.constant 0 : i32
    %c0_i32_0 = arith.constant 0 : i32
    return %c0_i32, %arg0 : i32, i32
  }
}

</mosaic_0001>

<llo_original>
// kernel: tpu_custom_call.1
$region0: #{tpu_custom_call.1}
  #allocation0 [shape = 'u32[]', space=smem, size = 0x4, offset = 0x4, fixed_abs, tag = 'smem constant byte address 0x4 - core index']
  #allocation1 [shape = 'u32[72,128]{1,0:T(1,128)}', space=vmem, size = 0x9000, scoped, tag = 'internal scratch']
  %s0 = inlined_call_operand.hbm [shape: bf16[2,32], index: 0, kind: input, shape index: {}]
  %s1 = inlined_call_operand.hbm [shape: bf16[32,64], index: 1, kind: input, shape index: {}]
  %s2 = inlined_call_operand.vmem [shape: s8[2,64], index: 2, kind: input, shape index: {}]
  %s3 = inlined_call_operand.hbm [shape: bf16[2,64], index: 3, kind: output, shape index: {}]
  %s4 = sld [smem:[#allocation0]]
  $region30: #{tpu_custom_call.1} parent=0
    _
  %s6 = ssub.s32 1, %s4
  %s7 = scalar_select 0, %s6, %s4
  $region1: #{tpu_custom_call.1} parent=0
    #allocation2 [shape = 'u8[512]{0}', space=vmem, size = 0x400, scoped, tag = 'input window, operand 0, single buffered']
    #allocation3 [shape = 's32[1]{0}', space=sflag, size = 0x4, scoped, tag = 'scoped memory for tpu_custom_call.1']
    #allocation4 [shape = 's32[1]{0}', space=sflag, size = 0x4, scoped, tag = 'scoped memory for tpu_custom_call.1']
    #allocation5 [shape = 'u8[8192]{0}', space=vmem, size = 0x2000, scoped, tag = 'input window, operand 1, single buffered']
    #allocation6 [shape = 's32[1]{0}', space=sflag, size = 0x4, scoped, tag = 'scoped memory for tpu_custom_call.1']
    #allocation7 [shape = 'u8[512]{0}', space=vmem, size = 0x400, scoped, tag = 'output window, operand 0, single buffered']
    %8 = vsyncpa [#allocation3], 0
    %9 = vsyncpa [#allocation6], 0
    %10 = vsyncpa [#allocation4], 0
    // Predicated region
    $region2: #{tpu_custom_call.1} parent=1 // pred_check
      _
    $region3: #{tpu_custom_call.1} parent=1 // pred_check_branch
      %12 = sbr.rel (0) target = $region5
    $region4: #{tpu_custom_call.1} parent=1 // pred_region
      %14 = vsyncadd [#allocation3], 0
      %s16 = sshll.u32 %s0, 4
      %s17 = int_to_ptr.hbm [resolvable:$true] %s16
      %s18 = sshll.u32 [#allocation2], 4
      %s19 = int_to_ptr.vmem [resolvable:$true] %s18
      %21 = dma.hbm_to_vmem [thread:$0]  %s17, 16, %s19, [#allocation3]
    $region5: #{tpu_custom_call.1} parent=1 // pred_fallthru
      _
    // Predicated region
    $region6: #{tpu_custom_call.1} parent=1 // pred_check
      _
    $region7: #{tpu_custom_call.1} parent=1 // pred_check_branch
      %23 = sbr.rel (0) target = $region9
    $region8: #{tpu_custom_call.1} parent=1 // pred_region
      %25 = vsyncadd [#allocation6], 0
      %s26 = sshll.u32 %s1, 4
      %s27 = int_to_ptr.hbm [resolvable:$true] %s26
      %s28 = sshll.u32 [#allocation5], 4
      %s29 = int_to_ptr.vmem [resolvable:$true] %s28
      %34 = dma.hbm_to_vmem [thread:$0]  %s27, 256, %s29, [#allocation6], 64, 64, 4
    $region9: #{tpu_custom_call.1} parent=1 // pred_fallthru
      _
    // Predicated region
    $region10: #{tpu_custom_call.1} parent=1 // pred_check
      _
    $region11: #{tpu_custom_call.1} parent=1 // pred_check_branch
      %36 = sbr.rel (0) target = $region13
    $region12: #{tpu_custom_call.1} parent=1 // pred_region
      _
    $region13: #{tpu_custom_call.1} parent=1 // pred_fallthru
      _
    // Predicated region
    $region14: #{tpu_custom_call.1} parent=1 // pred_check
      _
    $region15: #{tpu_custom_call.1} parent=1 // pred_check_branch
      %38 = sbr.rel (0) target = $region17
    $region16: #{tpu_custom_call.1} parent=1 // pred_region
      %40 = dma.done [#allocation3], 16
    $region17: #{tpu_custom_call.1} parent=1 // pred_fallthru
      _
    // Predicated region
    $region18: #{tpu_custom_call.1} parent=1 // pred_check
      _
    $region19: #{tpu_custom_call.1} parent=1 // pred_check_branch
      %42 = sbr.rel (0) target = $region21
    $region20: #{tpu_custom_call.1} parent=1 // pred_region
      %44 = dma.done [#allocation6], 256
    $region21: #{tpu_custom_call.1} parent=1 // pred_fallthru
      _
    %v46 = vld [vmem:[#allocation2] sm:$0x1]
    %v47 = vld [vmem:[#allocation5] sm:$0xf]
    %v48 = vld [vmem:[#allocation5 + $0x4] sm:$0xf]
    %v49 = vld [vmem:[#allocation5 + $0x8] sm:$0xf]
    %v50 = vld [vmem:[#allocation5 + $0xc] sm:$0xf]
    %v51 = vld [vmem:[%s2] sm:$0x1]
    %v52 = vunpack.c.0.s8 %v51
    %v53 = vcvt.s32.f32 %v52
    %v54 = vmul.f32 %v53, -1e+09
    %v59 = vunpack.c.l.b16 %v47
    %v60 = vunpack.c.l.b16 %v48
    %v61 = vunpack.c.l.b16 %v49
    %v62 = vunpack.c.l.b16 %v50
    %v63 = vpack.c.b16 %v60, %v59
    %v64 = vpack.c.b16 %v62, %v61
    %vm67 = vcmask 261120
    %v69 = vsel %vm67, %v46, 0
    %71 = vmatpush.bf16.msra.mxu0 0
    %72 = vmatpush.bf16.msra.mxu0 0
    %73 = vmatpush.bf16.msra.mxu0 0
    %74 = vmatpush.bf16.msra.mxu0 0
    %75 = vmatpush.bf16.msra.mxu0 0
    %76 = vmatpush.bf16.msra.mxu0 0
    %77 = vmatpush.bf16.msra.mxu0 %v64
    %78 = vmatpush.bf16.msra.mxu0 %v63
    %79 = vmatmul.bf16.gmra.mxu0 %v69
    %v80 = vpop.f32.mrf.mxu0
    %v81 = vadd.f32 %v54, %v80
    %v82 = vpop.f32.mrf.mxu0
    %83 = vdwg.mxu0
    %v84 = vxor.u32 %v81, 2147483648
    %v85 = vmul.f32 %v84, 1.442695
    %v86 = vpow.pop %v85
    %v87 = vadd.f32 %v86, 1.0
    %v88 = vrcp.pop %v87
    %v89 = vmul.f32 %v87, %v88
    %v90 = vsub.f32 1.0, %v89
    %v91 = vmul.f32 %v88, %v90
    %v92 = vadd.f32 %v88, %v91
    %vm93 = vweird.f32 %v87
    %vm94 = vweird.f32 %v88
    %vm95 = vmor %vm93, %vm94
    %v96 = vsel %vm95, %v88, %v92
    %v97 = vand.u32 2147483647, %v87
    %vm98 = vcmp.eq.f32.partialorder %v97, 8.507059e+37
    %v99 = vand.u32 %v87, 2147483648
    %v100 = vor.u32 1.1754944e-38, %v99
    %v101 = vsel %vm98, %v100, %v96
    %v102 = vmul.f32 1.0, %v101
    %v103 = vpack.c.bf16 %v102, %v102
    %104 = vst [vmem:[#allocation7] sm:$0x1] %v103
    // Predicated region
    $region22: #{tpu_custom_call.1} parent=1 // pred_check
      _
    $region23: #{tpu_custom_call.1} parent=1 // pred_check_branch
      %106 = sbr.rel (0) target = $region25
    $region24: #{tpu_custom_call.1} parent=1 // pred_region
      %108 = vsyncadd [#allocation4], 0
      %s110 = sshll.u32 [#allocation7], 4
      %s111 = int_to_ptr.vmem [resolvable:$true] %s110
      %s112 = sshll.u32 %s3, 4
      %s113 = int_to_ptr.hbm [resolvable:$true] %s112
      %115 = dma.vmem_to_hbm [thread:$0]  %s111, 16, %s113, [#allocation4]
    $region25: #{tpu_custom_call.1} parent=1 // pred_fallthru
      _
    // Predicated region
    $region26: #{tpu_custom_call.1} parent=1 // pred_check
      _
    $region27: #{tpu_custom_call.1} parent=1 // pred_check_branch
      %117 = sbr.rel (0) target = $region29
    $region28: #{tpu_custom_call.1} parent=1 // pred_region
      %119 = dma.done [#allocation4], 16
    $region29: #{tpu_custom_call.1} parent=1 // pred_fallthru
      _
    %120 = vsyncpa [#allocation3], 1
    %121 = vsyncpa [#allocation6], 1
    %122 = vsyncpa [#allocation4], 1

</llo_original>
